<compile_context>
chip_gen: v7x
topology: tpu7x:2x2x1
jax: 0.10.0
libtpu: 0.0.40
codegen_flags: <defaults>
</compile_context>

<pallas_src>
import functools

import jax
import jax.numpy as jnp
from jax.experimental import pallas as pl
from jax.experimental.pallas import tpu as pltpu

KH = KW = 3
CIN = 3
COUT = 6


def _conv_kernel(x_ref, w_ref, b_ref, o_ref, *, W, HW):
    # x_ref: (1, CIN, HW + PAD)  flattened image, spatial on the lane axis
    # w_ref: (COUT, CIN*KH*KW)   flat weights (one vreg)
    # b_ref: (COUT, 1)           bias
    # o_ref: (1, COUT, HW)       full-grid accumulator (lane-dense: 2x128 lanes)
    w = w_ref[...]                                  # (COUT, 27)
    acc = jnp.zeros((COUT, HW), dtype=jnp.float32)  # (6, 256) ~ 2 vregs

    # Fully unrolled VPU multiply-adds: 9 taps x 3 input channels.
    for kh in range(KH):
        for kw in range(KW):
            off = kh * W + kw
            # Shifted flat window: xs[ci, p] = x[ci, p + off]  (static slice,
            # valid for every valid output position p = h*W + w).
            xs = x_ref[0, :, off:off + HW]          # (CIN, HW)
            for ci in range(CIN):
                idx = (ci * KH + kh) * KW + kw      # matches (COUT, CIN, KH, KW) flatten
                w_col = w[:, idx]                   # (COUT,) along sublanes
                acc = acc + w_col[:, None] * xs[ci][None, :]

    acc = acc + b_ref[...]                          # (COUT, 1) broadcast over lanes
    o_ref[0] = acc.astype(o_ref.dtype)


@jax.jit
def prongs_forward(x_nchw, weight_oihw, bias):
    """x_nchw: (N, 3, H, W) f32; weight_oihw: (6, 3, 3, 3); bias: (6,)."""
    N, Cin, H, W = x_nchw.shape
    assert Cin == CIN
    Ho, Wo = H - KH + 1, W - KW + 1
    HW = H * W
    PAD = (KH - 1) * W + (KW - 1)       # max tap shift (34 for 16x16)

    # Layout plumbing only (no transposes): merge spatial dims (free reshape),
    # small zero pad on the lane axis, flatten weights, 2-D bias.
    x_flat = jnp.pad(x_nchw.reshape(N, CIN, HW), ((0, 0), (0, 0), (0, PAD)))
    w_flat = weight_oihw.reshape(COUT, CIN * KH * KW)
    b_2d = bias.reshape(COUT, 1)

    kernel = functools.partial(_conv_kernel, W=W, HW=HW)

    out_flat = pl.pallas_call(
        kernel,
        out_shape=jax.ShapeDtypeStruct((N, COUT, HW), x_nchw.dtype),
        grid=(N,),
        in_specs=[
            pl.BlockSpec((1, CIN, HW + PAD), lambda n: (n, 0, 0)),
            pl.BlockSpec((COUT, CIN * KH * KW), lambda n: (0, 0)),
            pl.BlockSpec((COUT, 1), lambda n: (0, 0)),
        ],
        out_specs=pl.BlockSpec((1, COUT, HW), lambda n: (n, 0, 0)),
        compiler_params=pltpu.CompilerParams(
            dimension_semantics=("parallel",)),
    )(x_flat, w_flat, b_2d)

    # Free reshape + tiny slice: drop the invalid right/bottom border of the
    # full-grid accumulator -> valid VALID-conv output, already in NCHW.
    return out_flat.reshape(N, COUT, H, W)[:, :, :Ho, :Wo]


if __name__ == "__main__":
    key = jax.random.PRNGKey(0)
    kx, kw, kb = jax.random.split(key, 3)

    # Deterministic synthetic parameters (Kaiming-uniform-like bound).
    bound = 1.0 / (CIN * KH * KW) ** 0.5
    weight = jax.random.uniform(kw, (COUT, CIN, KH, KW),
                                minval=-bound, maxval=bound, dtype=jnp.float32)
    bias = jax.random.uniform(kb, (COUT,),
                              minval=-bound, maxval=bound, dtype=jnp.float32)

    # Small input consistent with the module: N=2, C=3, H=W=16
    x = jax.random.normal(kx, (2, CIN, 16, 16), dtype=jnp.float32)

    out = prongs_forward(x, weight, bias)
    out = jax.block_until_ready(out)
    assert out.shape == (2, COUT, 14, 14), out.shape

    # Cross-check against XLA's conv for correctness.
    ref = jax.lax.conv_general_dilated(
        x, weight, window_strides=(1, 1), padding="VALID",
        dimension_numbers=("NCHW", "OIHW", "NCHW")) + bias.reshape(1, COUT, 1, 1)
    assert jnp.allclose(out, ref, atol=1e-5, rtol=1e-5)

    print("KERNEL_OK")
</pallas_src>

<mosaic_0001>
module attributes {stable_mosaic.version = 11 : i64} {
  func.func @_conv_kernel(%arg0: i32, %arg1: memref<1x3x290xf32, #tpu.memory_space<vmem>>, %arg2: memref<6x27xf32, #tpu.memory_space<vmem>>, %arg3: memref<6x1xf32, #tpu.memory_space<vmem>>, %arg4: memref<1x6x256xf32, #tpu.memory_space<vmem>>) attributes {dimension_semantics = [#tpu.dimension_semantics<parallel>], iteration_bounds = array<i64: 2>, scalar_prefetch = 0 : i64, scratch_operands = 0 : i64, tpu.core_type = #tpu.core_type<tc>, window_params = [{transform_indices = @transform_0, window_bounds = array<i64: 1, 3, 290>}, {pipeline_mode = #tpu.pipeline_mode<synchronous>, transform_indices = @transform_1, window_bounds = array<i64: 6, 27>}, {pipeline_mode = #tpu.pipeline_mode<synchronous>, transform_indices = @transform_2, window_bounds = array<i64: 6, 1>}, {transform_indices = @transform_3, window_bounds = array<i64: 1, 6, 256>}]} {
    %c0 = arith.constant 0 : index
    %c0_0 = arith.constant 0 : index
    %0 = vector.load %arg2[%c0, %c0_0] : memref<6x27xf32, #tpu.memory_space<vmem>>, vector<6x27xf32>
    %cst = arith.constant 0.000000e+00 : f32
    %1 = vector.broadcast %cst : f32 to vector<6x256xf32>
    %c0_1 = arith.constant 0 : index
    %c0_2 = arith.constant 0 : index
    %c0_3 = arith.constant 0 : index
    %2 = vector.load %arg1[%c0_1, %c0_2, %c0_3] : memref<1x3x290xf32, #tpu.memory_space<vmem>>, vector<1x3x256xf32>
    %3 = vector.shape_cast %2 : vector<1x3x256xf32> to vector<3x256xf32>
    %4 = vector.extract_strided_slice %0 {offsets = [0, 0], sizes = [6, 1], strides = [1, 1]} : vector<6x27xf32> to vector<6x1xf32>
    %5 = vector.shape_cast %4 : vector<6x1xf32> to vector<6xf32>
    %6 = vector.shape_cast %5 : vector<6xf32> to vector<6x1xf32>
    %7 = vector.extract_strided_slice %3 {offsets = [0, 0], sizes = [1, 256], strides = [1, 1]} : vector<3x256xf32> to vector<1x256xf32>
    %8 = vector.shape_cast %7 : vector<1x256xf32> to vector<256xf32>
    %9 = vector.shape_cast %8 : vector<256xf32> to vector<1x256xf32>
    %10 = vector.broadcast %6 : vector<6x1xf32> to vector<6x256xf32>
    %11 = vector.broadcast %9 : vector<1x256xf32> to vector<6x256xf32>
    %12 = arith.mulf %10, %11 : vector<6x256xf32>
    %13 = arith.addf %1, %12 : vector<6x256xf32>
    %14 = vector.extract_strided_slice %0 {offsets = [0, 9], sizes = [6, 1], strides = [1, 1]} : vector<6x27xf32> to vector<6x1xf32>
    %15 = vector.shape_cast %14 : vector<6x1xf32> to vector<6xf32>
    %16 = vector.shape_cast %15 : vector<6xf32> to vector<6x1xf32>
    %17 = vector.extract_strided_slice %3 {offsets = [1, 0], sizes = [1, 256], strides = [1, 1]} : vector<3x256xf32> to vector<1x256xf32>
    %18 = vector.shape_cast %17 : vector<1x256xf32> to vector<256xf32>
    %19 = vector.shape_cast %18 : vector<256xf32> to vector<1x256xf32>
    %20 = vector.broadcast %16 : vector<6x1xf32> to vector<6x256xf32>
    %21 = vector.broadcast %19 : vector<1x256xf32> to vector<6x256xf32>
    %22 = arith.mulf %20, %21 : vector<6x256xf32>
    %23 = arith.addf %13, %22 : vector<6x256xf32>
    %24 = vector.extract_strided_slice %0 {offsets = [0, 18], sizes = [6, 1], strides = [1, 1]} : vector<6x27xf32> to vector<6x1xf32>
    %25 = vector.shape_cast %24 : vector<6x1xf32> to vector<6xf32>
    %26 = vector.shape_cast %25 : vector<6xf32> to vector<6x1xf32>
    %27 = vector.extract_strided_slice %3 {offsets = [2, 0], sizes = [1, 256], strides = [1, 1]} : vector<3x256xf32> to vector<1x256xf32>
    %28 = vector.shape_cast %27 : vector<1x256xf32> to vector<256xf32>
    %29 = vector.shape_cast %28 : vector<256xf32> to vector<1x256xf32>
    %30 = vector.broadcast %26 : vector<6x1xf32> to vector<6x256xf32>
    %31 = vector.broadcast %29 : vector<1x256xf32> to vector<6x256xf32>
    %32 = arith.mulf %30, %31 : vector<6x256xf32>
    %33 = arith.addf %23, %32 : vector<6x256xf32>
    %c0_4 = arith.constant 0 : index
    %c0_5 = arith.constant 0 : index
    %c1 = arith.constant 1 : index
    %34 = vector.load %arg1[%c0_4, %c0_5, %c1] : memref<1x3x290xf32, #tpu.memory_space<vmem>>, vector<1x3x256xf32>
    %35 = vector.shape_cast %34 : vector<1x3x256xf32> to vector<3x256xf32>
    %36 = vector.extract_strided_slice %0 {offsets = [0, 1], sizes = [6, 1], strides = [1, 1]} : vector<6x27xf32> to vector<6x1xf32>
    %37 = vector.shape_cast %36 : vector<6x1xf32> to vector<6xf32>
    %38 = vector.shape_cast %37 : vector<6xf32> to vector<6x1xf32>
    %39 = vector.extract_strided_slice %35 {offsets = [0, 0], sizes = [1, 256], strides = [1, 1]} : vector<3x256xf32> to vector<1x256xf32>
    %40 = vector.shape_cast %39 : vector<1x256xf32> to vector<256xf32>
    %41 = vector.shape_cast %40 : vector<256xf32> to vector<1x256xf32>
    %42 = vector.broadcast %38 : vector<6x1xf32> to vector<6x256xf32>
    %43 = vector.broadcast %41 : vector<1x256xf32> to vector<6x256xf32>
    %44 = arith.mulf %42, %43 : vector<6x256xf32>
    %45 = arith.addf %33, %44 : vector<6x256xf32>
    %46 = vector.extract_strided_slice %0 {offsets = [0, 10], sizes = [6, 1], strides = [1, 1]} : vector<6x27xf32> to vector<6x1xf32>
    %47 = vector.shape_cast %46 : vector<6x1xf32> to vector<6xf32>
    %48 = vector.shape_cast %47 : vector<6xf32> to vector<6x1xf32>
    %49 = vector.extract_strided_slice %35 {offsets = [1, 0], sizes = [1, 256], strides = [1, 1]} : vector<3x256xf32> to vector<1x256xf32>
    %50 = vector.shape_cast %49 : vector<1x256xf32> to vector<256xf32>
    %51 = vector.shape_cast %50 : vector<256xf32> to vector<1x256xf32>
    %52 = vector.broadcast %48 : vector<6x1xf32> to vector<6x256xf32>
    %53 = vector.broadcast %51 : vector<1x256xf32> to vector<6x256xf32>
    %54 = arith.mulf %52, %53 : vector<6x256xf32>
    %55 = arith.addf %45, %54 : vector<6x256xf32>
    %56 = vector.extract_strided_slice %0 {offsets = [0, 19], sizes = [6, 1], strides = [1, 1]} : vector<6x27xf32> to vector<6x1xf32>
    %57 = vector.shape_cast %56 : vector<6x1xf32> to vector<6xf32>
    %58 = vector.shape_cast %57 : vector<6xf32> to vector<6x1xf32>
    %59 = vector.extract_strided_slice %35 {offsets = [2, 0], sizes = [1, 256], strides = [1, 1]} : vector<3x256xf32> to vector<1x256xf32>
    %60 = vector.shape_cast %59 : vector<1x256xf32> to vector<256xf32>
    %61 = vector.shape_cast %60 : vector<256xf32> to vector<1x256xf32>
    %62 = vector.broadcast %58 : vector<6x1xf32> to vector<6x256xf32>
    %63 = vector.broadcast %61 : vector<1x256xf32> to vector<6x256xf32>
    %64 = arith.mulf %62, %63 : vector<6x256xf32>
    %65 = arith.addf %55, %64 : vector<6x256xf32>
    %c0_6 = arith.constant 0 : index
    %c0_7 = arith.constant 0 : index
    %c2 = arith.constant 2 : index
    %66 = vector.load %arg1[%c0_6, %c0_7, %c2] : memref<1x3x290xf32, #tpu.memory_space<vmem>>, vector<1x3x256xf32>
    %67 = vector.shape_cast %66 : vector<1x3x256xf32> to vector<3x256xf32>
    %68 = vector.extract_strided_slice %0 {offsets = [0, 2], sizes = [6, 1], strides = [1, 1]} : vector<6x27xf32> to vector<6x1xf32>
    %69 = vector.shape_cast %68 : vector<6x1xf32> to vector<6xf32>
    %70 = vector.shape_cast %69 : vector<6xf32> to vector<6x1xf32>
    %71 = vector.extract_strided_slice %67 {offsets = [0, 0], sizes = [1, 256], strides = [1, 1]} : vector<3x256xf32> to vector<1x256xf32>
    %72 = vector.shape_cast %71 : vector<1x256xf32> to vector<256xf32>
    %73 = vector.shape_cast %72 : vector<256xf32> to vector<1x256xf32>
    %74 = vector.broadcast %70 : vector<6x1xf32> to vector<6x256xf32>
    %75 = vector.broadcast %73 : vector<1x256xf32> to vector<6x256xf32>
    %76 = arith.mulf %74, %75 : vector<6x256xf32>
    %77 = arith.addf %65, %76 : vector<6x256xf32>
    %78 = vector.extract_strided_slice %0 {offsets = [0, 11], sizes = [6, 1], strides = [1, 1]} : vector<6x27xf32> to vector<6x1xf32>
    %79 = vector.shape_cast %78 : vector<6x1xf32> to vector<6xf32>
    %80 = vector.shape_cast %79 : vector<6xf32> to vector<6x1xf32>
    %81 = vector.extract_strided_slice %67 {offsets = [1, 0], sizes = [1, 256], strides = [1, 1]} : vector<3x256xf32> to vector<1x256xf32>
    %82 = vector.shape_cast %81 : vector<1x256xf32> to vector<256xf32>
    %83 = vector.shape_cast %82 : vector<256xf32> to vector<1x256xf32>
    %84 = vector.broadcast %80 : vector<6x1xf32> to vector<6x256xf32>
    %85 = vector.broadcast %83 : vector<1x256xf32> to vector<6x256xf32>
    %86 = arith.mulf %84, %85 : vector<6x256xf32>
    %87 = arith.addf %77, %86 : vector<6x256xf32>
    %88 = vector.extract_strided_slice %0 {offsets = [0, 20], sizes = [6, 1], strides = [1, 1]} : vector<6x27xf32> to vector<6x1xf32>
    %89 = vector.shape_cast %88 : vector<6x1xf32> to vector<6xf32>
    %90 = vector.shape_cast %89 : vector<6xf32> to vector<6x1xf32>
    %91 = vector.extract_strided_slice %67 {offsets = [2, 0], sizes = [1, 256], strides = [1, 1]} : vector<3x256xf32> to vector<1x256xf32>
    %92 = vector.shape_cast %91 : vector<1x256xf32> to vector<256xf32>
    %93 = vector.shape_cast %92 : vector<256xf32> to vector<1x256xf32>
    %94 = vector.broadcast %90 : vector<6x1xf32> to vector<6x256xf32>
    %95 = vector.broadcast %93 : vector<1x256xf32> to vector<6x256xf32>
    %96 = arith.mulf %94, %95 : vector<6x256xf32>
    %97 = arith.addf %87, %96 : vector<6x256xf32>
    %c0_8 = arith.constant 0 : index
    %c0_9 = arith.constant 0 : index
    %c16 = arith.constant 16 : index
    %98 = vector.load %arg1[%c0_8, %c0_9, %c16] : memref<1x3x290xf32, #tpu.memory_space<vmem>>, vector<1x3x256xf32>
    %99 = vector.shape_cast %98 : vector<1x3x256xf32> to vector<3x256xf32>
    %100 = vector.extract_strided_slice %0 {offsets = [0, 3], sizes = [6, 1], strides = [1, 1]} : vector<6x27xf32> to vector<6x1xf32>
    %101 = vector.shape_cast %100 : vector<6x1xf32> to vector<6xf32>
    %102 = vector.shape_cast %101 : vector<6xf32> to vector<6x1xf32>
    %103 = vector.extract_strided_slice %99 {offsets = [0, 0], sizes = [1, 256], strides = [1, 1]} : vector<3x256xf32> to vector<1x256xf32>
    %104 = vector.shape_cast %103 : vector<1x256xf32> to vector<256xf32>
    %105 = vector.shape_cast %104 : vector<256xf32> to vector<1x256xf32>
    %106 = vector.broadcast %102 : vector<6x1xf32> to vector<6x256xf32>
    %107 = vector.broadcast %105 : vector<1x256xf32> to vector<6x256xf32>
    %108 = arith.mulf %106, %107 : vector<6x256xf32>
    %109 = arith.addf %97, %108 : vector<6x256xf32>
    %110 = vector.extract_strided_slice %0 {offsets = [0, 12], sizes = [6, 1], strides = [1, 1]} : vector<6x27xf32> to vector<6x1xf32>
    %111 = vector.shape_cast %110 : vector<6x1xf32> to vector<6xf32>
    %112 = vector.shape_cast %111 : vector<6xf32> to vector<6x1xf32>
    %113 = vector.extract_strided_slice %99 {offsets = [1, 0], sizes = [1, 256], strides = [1, 1]} : vector<3x256xf32> to vector<1x256xf32>
    %114 = vector.shape_cast %113 : vector<1x256xf32> to vector<256xf32>
    %115 = vector.shape_cast %114 : vector<256xf32> to vector<1x256xf32>
    %116 = vector.broadcast %112 : vector<6x1xf32> to vector<6x256xf32>
    %117 = vector.broadcast %115 : vector<1x256xf32> to vector<6x256xf32>
    %118 = arith.mulf %116, %117 : vector<6x256xf32>
    %119 = arith.addf %109, %118 : vector<6x256xf32>
    %120 = vector.extract_strided_slice %0 {offsets = [0, 21], sizes = [6, 1], strides = [1, 1]} : vector<6x27xf32> to vector<6x1xf32>
    %121 = vector.shape_cast %120 : vector<6x1xf32> to vector<6xf32>
    %122 = vector.shape_cast %121 : vector<6xf32> to vector<6x1xf32>
    %123 = vector.extract_strided_slice %99 {offsets = [2, 0], sizes = [1, 256], strides = [1, 1]} : vector<3x256xf32> to vector<1x256xf32>
    %124 = vector.shape_cast %123 : vector<1x256xf32> to vector<256xf32>
    %125 = vector.shape_cast %124 : vector<256xf32> to vector<1x256xf32>
    %126 = vector.broadcast %122 : vector<6x1xf32> to vector<6x256xf32>
    %127 = vector.broadcast %125 : vector<1x256xf32> to vector<6x256xf32>
    %128 = arith.mulf %126, %127 : vector<6x256xf32>
    %129 = arith.addf %119, %128 : vector<6x256xf32>
    %c0_10 = arith.constant 0 : index
    %c0_11 = arith.constant 0 : index
    %c17 = arith.constant 17 : index
    %130 = vector.load %arg1[%c0_10, %c0_11, %c17] : memref<1x3x290xf32, #tpu.memory_space<vmem>>, vector<1x3x256xf32>
    %131 = vector.shape_cast %130 : vector<1x3x256xf32> to vector<3x256xf32>
    %132 = vector.extract_strided_slice %0 {offsets = [0, 4], sizes = [6, 1], strides = [1, 1]} : vector<6x27xf32> to vector<6x1xf32>
    %133 = vector.shape_cast %132 : vector<6x1xf32> to vector<6xf32>
    %134 = vector.shape_cast %133 : vector<6xf32> to vector<6x1xf32>
    %135 = vector.extract_strided_slice %131 {offsets = [0, 0], sizes = [1, 256], strides = [1, 1]} : vector<3x256xf32> to vector<1x256xf32>
    %136 = vector.shape_cast %135 : vector<1x256xf32> to vector<256xf32>
    %137 = vector.shape_cast %136 : vector<256xf32> to vector<1x256xf32>
    %138 = vector.broadcast %134 : vector<6x1xf32> to vector<6x256xf32>
    %139 = vector.broadcast %137 : vector<1x256xf32> to vector<6x256xf32>
    %140 = arith.mulf %138, %139 : vector<6x256xf32>
    %141 = arith.addf %129, %140 : vector<6x256xf32>
    %142 = vector.extract_strided_slice %0 {offsets = [0, 13], sizes = [6, 1], strides = [1, 1]} : vector<6x27xf32> to vector<6x1xf32>
    %143 = vector.shape_cast %142 : vector<6x1xf32> to vector<6xf32>
    %144 = vector.shape_cast %143 : vector<6xf32> to vector<6x1xf32>
    %145 = vector.extract_strided_slice %131 {offsets = [1, 0], sizes = [1, 256], strides = [1, 1]} : vector<3x256xf32> to vector<1x256xf32>
    %146 = vector.shape_cast %145 : vector<1x256xf32> to vector<256xf32>
    %147 = vector.shape_cast %146 : vector<256xf32> to vector<1x256xf32>
    %148 = vector.broadcast %144 : vector<6x1xf32> to vector<6x256xf32>
    %149 = vector.broadcast %147 : vector<1x256xf32> to vector<6x256xf32>
    %150 = arith.mulf %148, %149 : vector<6x256xf32>
    %151 = arith.addf %141, %150 : vector<6x256xf32>
    %152 = vector.extract_strided_slice %0 {offsets = [0, 22], sizes = [6, 1], strides = [1, 1]} : vector<6x27xf32> to vector<6x1xf32>
    %153 = vector.shape_cast %152 : vector<6x1xf32> to vector<6xf32>
    %154 = vector.shape_cast %153 : vector<6xf32> to vector<6x1xf32>
    %155 = vector.extract_strided_slice %131 {offsets = [2, 0], sizes = [1, 256], strides = [1, 1]} : vector<3x256xf32> to vector<1x256xf32>
    %156 = vector.shape_cast %155 : vector<1x256xf32> to vector<256xf32>
    %157 = vector.shape_cast %156 : vector<256xf32> to vector<1x256xf32>
    %158 = vector.broadcast %154 : vector<6x1xf32> to vector<6x256xf32>
    %159 = vector.broadcast %157 : vector<1x256xf32> to vector<6x256xf32>
    %160 = arith.mulf %158, %159 : vector<6x256xf32>
    %161 = arith.addf %151, %160 : vector<6x256xf32>
    %c0_12 = arith.constant 0 : index
    %c0_13 = arith.constant 0 : index
    %c18 = arith.constant 18 : index
    %162 = vector.load %arg1[%c0_12, %c0_13, %c18] : memref<1x3x290xf32, #tpu.memory_space<vmem>>, vector<1x3x256xf32>
    %163 = vector.shape_cast %162 : vector<1x3x256xf32> to vector<3x256xf32>
    %164 = vector.extract_strided_slice %0 {offsets = [0, 5], sizes = [6, 1], strides = [1, 1]} : vector<6x27xf32> to vector<6x1xf32>
    %165 = vector.shape_cast %164 : vector<6x1xf32> to vector<6xf32>
    %166 = vector.shape_cast %165 : vector<6xf32> to vector<6x1xf32>
    %167 = vector.extract_strided_slice %163 {offsets = [0, 0], sizes = [1, 256], strides = [1, 1]} : vector<3x256xf32> to vector<1x256xf32>
    %168 = vector.shape_cast %167 : vector<1x256xf32> to vector<256xf32>
    %169 = vector.shape_cast %168 : vector<256xf32> to vector<1x256xf32>
    %170 = vector.broadcast %166 : vector<6x1xf32> to vector<6x256xf32>
    %171 = vector.broadcast %169 : vector<1x256xf32> to vector<6x256xf32>
    %172 = arith.mulf %170, %171 : vector<6x256xf32>
    %173 = arith.addf %161, %172 : vector<6x256xf32>
    %174 = vector.extract_strided_slice %0 {offsets = [0, 14], sizes = [6, 1], strides = [1, 1]} : vector<6x27xf32> to vector<6x1xf32>
    %175 = vector.shape_cast %174 : vector<6x1xf32> to vector<6xf32>
    %176 = vector.shape_cast %175 : vector<6xf32> to vector<6x1xf32>
    %177 = vector.extract_strided_slice %163 {offsets = [1, 0], sizes = [1, 256], strides = [1, 1]} : vector<3x256xf32> to vector<1x256xf32>
    %178 = vector.shape_cast %177 : vector<1x256xf32> to vector<256xf32>
    %179 = vector.shape_cast %178 : vector<256xf32> to vector<1x256xf32>
    %180 = vector.broadcast %176 : vector<6x1xf32> to vector<6x256xf32>
    %181 = vector.broadcast %179 : vector<1x256xf32> to vector<6x256xf32>
    %182 = arith.mulf %180, %181 : vector<6x256xf32>
    %183 = arith.addf %173, %182 : vector<6x256xf32>
    %184 = vector.extract_strided_slice %0 {offsets = [0, 23], sizes = [6, 1], strides = [1, 1]} : vector<6x27xf32> to vector<6x1xf32>
    %185 = vector.shape_cast %184 : vector<6x1xf32> to vector<6xf32>
    %186 = vector.shape_cast %185 : vector<6xf32> to vector<6x1xf32>
    %187 = vector.extract_strided_slice %163 {offsets = [2, 0], sizes = [1, 256], strides = [1, 1]} : vector<3x256xf32> to vector<1x256xf32>
    %188 = vector.shape_cast %187 : vector<1x256xf32> to vector<256xf32>
    %189 = vector.shape_cast %188 : vector<256xf32> to vector<1x256xf32>
    %190 = vector.broadcast %186 : vector<6x1xf32> to vector<6x256xf32>
    %191 = vector.broadcast %189 : vector<1x256xf32> to vector<6x256xf32>
    %192 = arith.mulf %190, %191 : vector<6x256xf32>
    %193 = arith.addf %183, %192 : vector<6x256xf32>
    %c0_14 = arith.constant 0 : index
    %c0_15 = arith.constant 0 : index
    %c32 = arith.constant 32 : index
    %194 = vector.load %arg1[%c0_14, %c0_15, %c32] : memref<1x3x290xf32, #tpu.memory_space<vmem>>, vector<1x3x256xf32>
    %195 = vector.shape_cast %194 : vector<1x3x256xf32> to vector<3x256xf32>
    %196 = vector.extract_strided_slice %0 {offsets = [0, 6], sizes = [6, 1], strides = [1, 1]} : vector<6x27xf32> to vector<6x1xf32>
    %197 = vector.shape_cast %196 : vector<6x1xf32> to vector<6xf32>
    %198 = vector.shape_cast %197 : vector<6xf32> to vector<6x1xf32>
    %199 = vector.extract_strided_slice %195 {offsets = [0, 0], sizes = [1, 256], strides = [1, 1]} : vector<3x256xf32> to vector<1x256xf32>
    %200 = vector.shape_cast %199 : vector<1x256xf32> to vector<256xf32>
    %201 = vector.shape_cast %200 : vector<256xf32> to vector<1x256xf32>
    %202 = vector.broadcast %198 : vector<6x1xf32> to vector<6x256xf32>
    %203 = vector.broadcast %201 : vector<1x256xf32> to vector<6x256xf32>
    %204 = arith.mulf %202, %203 : vector<6x256xf32>
    %205 = arith.addf %193, %204 : vector<6x256xf32>
    %206 = vector.extract_strided_slice %0 {offsets = [0, 15], sizes = [6, 1], strides = [1, 1]} : vector<6x27xf32> to vector<6x1xf32>
    %207 = vector.shape_cast %206 : vector<6x1xf32> to vector<6xf32>
    %208 = vector.shape_cast %207 : vector<6xf32> to vector<6x1xf32>
    %209 = vector.extract_strided_slice %195 {offsets = [1, 0], sizes = [1, 256], strides = [1, 1]} : vector<3x256xf32> to vector<1x256xf32>
    %210 = vector.shape_cast %209 : vector<1x256xf32> to vector<256xf32>
    %211 = vector.shape_cast %210 : vector<256xf32> to vector<1x256xf32>
    %212 = vector.broadcast %208 : vector<6x1xf32> to vector<6x256xf32>
    %213 = vector.broadcast %211 : vector<1x256xf32> to vector<6x256xf32>
    %214 = arith.mulf %212, %213 : vector<6x256xf32>
    %215 = arith.addf %205, %214 : vector<6x256xf32>
    %216 = vector.extract_strided_slice %0 {offsets = [0, 24], sizes = [6, 1], strides = [1, 1]} : vector<6x27xf32> to vector<6x1xf32>
    %217 = vector.shape_cast %216 : vector<6x1xf32> to vector<6xf32>
    %218 = vector.shape_cast %217 : vector<6xf32> to vector<6x1xf32>
    %219 = vector.extract_strided_slice %195 {offsets = [2, 0], sizes = [1, 256], strides = [1, 1]} : vector<3x256xf32> to vector<1x256xf32>
    %220 = vector.shape_cast %219 : vector<1x256xf32> to vector<256xf32>
    %221 = vector.shape_cast %220 : vector<256xf32> to vector<1x256xf32>
    %222 = vector.broadcast %218 : vector<6x1xf32> to vector<6x256xf32>
    %223 = vector.broadcast %221 : vector<1x256xf32> to vector<6x256xf32>
    %224 = arith.mulf %222, %223 : vector<6x256xf32>
    %225 = arith.addf %215, %224 : vector<6x256xf32>
    %c0_16 = arith.constant 0 : index
    %c0_17 = arith.constant 0 : index
    %c33 = arith.constant 33 : index
    %226 = vector.load %arg1[%c0_16, %c0_17, %c33] : memref<1x3x290xf32, #tpu.memory_space<vmem>>, vector<1x3x256xf32>
    %227 = vector.shape_cast %226 : vector<1x3x256xf32> to vector<3x256xf32>
    %228 = vector.extract_strided_slice %0 {offsets = [0, 7], sizes = [6, 1], strides = [1, 1]} : vector<6x27xf32> to vector<6x1xf32>
    %229 = vector.shape_cast %228 : vector<6x1xf32> to vector<6xf32>
    %230 = vector.shape_cast %229 : vector<6xf32> to vector<6x1xf32>
    %231 = vector.extract_strided_slice %227 {offsets = [0, 0], sizes = [1, 256], strides = [1, 1]} : vector<3x256xf32> to vector<1x256xf32>
    %232 = vector.shape_cast %231 : vector<1x256xf32> to vector<256xf32>
    %233 = vector.shape_cast %232 : vector<256xf32> to vector<1x256xf32>
    %234 = vector.broadcast %230 : vector<6x1xf32> to vector<6x256xf32>
    %235 = vector.broadcast %233 : vector<1x256xf32> to vector<6x256xf32>
    %236 = arith.mulf %234, %235 : vector<6x256xf32>
    %237 = arith.addf %225, %236 : vector<6x256xf32>
    %238 = vector.extract_strided_slice %0 {offsets = [0, 16], sizes = [6, 1], strides = [1, 1]} : vector<6x27xf32> to vector<6x1xf32>
    %239 = vector.shape_cast %238 : vector<6x1xf32> to vector<6xf32>
    %240 = vector.shape_cast %239 : vector<6xf32> to vector<6x1xf32>
    %241 = vector.extract_strided_slice %227 {offsets = [1, 0], sizes = [1, 256], strides = [1, 1]} : vector<3x256xf32> to vector<1x256xf32>
    %242 = vector.shape_cast %241 : vector<1x256xf32> to vector<256xf32>
    %243 = vector.shape_cast %242 : vector<256xf32> to vector<1x256xf32>
    %244 = vector.broadcast %240 : vector<6x1xf32> to vector<6x256xf32>
    %245 = vector.broadcast %243 : vector<1x256xf32> to vector<6x256xf32>
    %246 = arith.mulf %244, %245 : vector<6x256xf32>
    %247 = arith.addf %237, %246 : vector<6x256xf32>
    %248 = vector.extract_strided_slice %0 {offsets = [0, 25], sizes = [6, 1], strides = [1, 1]} : vector<6x27xf32> to vector<6x1xf32>
    %249 = vector.shape_cast %248 : vector<6x1xf32> to vector<6xf32>
    %250 = vector.shape_cast %249 : vector<6xf32> to vector<6x1xf32>
    %251 = vector.extract_strided_slice %227 {offsets = [2, 0], sizes = [1, 256], strides = [1, 1]} : vector<3x256xf32> to vector<1x256xf32>
    %252 = vector.shape_cast %251 : vector<1x256xf32> to vector<256xf32>
    %253 = vector.shape_cast %252 : vector<256xf32> to vector<1x256xf32>
    %254 = vector.broadcast %250 : vector<6x1xf32> to vector<6x256xf32>
    %255 = vector.broadcast %253 : vector<1x256xf32> to vector<6x256xf32>
    %256 = arith.mulf %254, %255 : vector<6x256xf32>
    %257 = arith.addf %247, %256 : vector<6x256xf32>
    %c0_18 = arith.constant 0 : index
    %c0_19 = arith.constant 0 : index
    %c34 = arith.constant 34 : index
    %258 = vector.load %arg1[%c0_18, %c0_19, %c34] : memref<1x3x290xf32, #tpu.memory_space<vmem>>, vector<1x3x256xf32>
    %259 = vector.shape_cast %258 : vector<1x3x256xf32> to vector<3x256xf32>
    %260 = vector.extract_strided_slice %0 {offsets = [0, 8], sizes = [6, 1], strides = [1, 1]} : vector<6x27xf32> to vector<6x1xf32>
    %261 = vector.shape_cast %260 : vector<6x1xf32> to vector<6xf32>
    %262 = vector.shape_cast %261 : vector<6xf32> to vector<6x1xf32>
    %263 = vector.extract_strided_slice %259 {offsets = [0, 0], sizes = [1, 256], strides = [1, 1]} : vector<3x256xf32> to vector<1x256xf32>
    %264 = vector.shape_cast %263 : vector<1x256xf32> to vector<256xf32>
    %265 = vector.shape_cast %264 : vector<256xf32> to vector<1x256xf32>
    %266 = vector.broadcast %262 : vector<6x1xf32> to vector<6x256xf32>
    %267 = vector.broadcast %265 : vector<1x256xf32> to vector<6x256xf32>
    %268 = arith.mulf %266, %267 : vector<6x256xf32>
    %269 = arith.addf %257, %268 : vector<6x256xf32>
    %270 = vector.extract_strided_slice %0 {offsets = [0, 17], sizes = [6, 1], strides = [1, 1]} : vector<6x27xf32> to vector<6x1xf32>
    %271 = vector.shape_cast %270 : vector<6x1xf32> to vector<6xf32>
    %272 = vector.shape_cast %271 : vector<6xf32> to vector<6x1xf32>
    %273 = vector.extract_strided_slice %259 {offsets = [1, 0], sizes = [1, 256], strides = [1, 1]} : vector<3x256xf32> to vector<1x256xf32>
    %274 = vector.shape_cast %273 : vector<1x256xf32> to vector<256xf32>
    %275 = vector.shape_cast %274 : vector<256xf32> to vector<1x256xf32>
    %276 = vector.broadcast %272 : vector<6x1xf32> to vector<6x256xf32>
    %277 = vector.broadcast %275 : vector<1x256xf32> to vector<6x256xf32>
    %278 = arith.mulf %276, %277 : vector<6x256xf32>
    %279 = arith.addf %269, %278 : vector<6x256xf32>
    %280 = vector.extract_strided_slice %0 {offsets = [0, 26], sizes = [6, 1], strides = [1, 1]} : vector<6x27xf32> to vector<6x1xf32>
    %281 = vector.shape_cast %280 : vector<6x1xf32> to vector<6xf32>
    %282 = vector.shape_cast %281 : vector<6xf32> to vector<6x1xf32>
    %283 = vector.extract_strided_slice %259 {offsets = [2, 0], sizes = [1, 256], strides = [1, 1]} : vector<3x256xf32> to vector<1x256xf32>
    %284 = vector.shape_cast %283 : vector<1x256xf32> to vector<256xf32>
    %285 = vector.shape_cast %284 : vector<256xf32> to vector<1x256xf32>
    %286 = vector.broadcast %282 : vector<6x1xf32> to vector<6x256xf32>
    %287 = vector.broadcast %285 : vector<1x256xf32> to vector<6x256xf32>
    %288 = arith.mulf %286, %287 : vector<6x256xf32>
    %289 = arith.addf %279, %288 : vector<6x256xf32>
    %c0_20 = arith.constant 0 : index
    %c0_21 = arith.constant 0 : index
    %290 = vector.load %arg3[%c0_20, %c0_21] : memref<6x1xf32, #tpu.memory_space<vmem>>, vector<6x1xf32>
    %291 = vector.broadcast %290 : vector<6x1xf32> to vector<6x256xf32>
    %292 = arith.addf %289, %291 : vector<6x256xf32>
    %c0_22 = arith.constant 0 : index
    %c0_23 = arith.constant 0 : index
    %c0_24 = arith.constant 0 : index
    %293 = vector.load %arg4[%c0_22, %c0_23, %c0_24] : memref<1x6x256xf32, #tpu.memory_space<vmem>>, vector<1x6x256xf32>
    %294 = vector.shape_cast %293 : vector<1x6x256xf32> to vector<6x256xf32>
    %295 = vector.shape_cast %292 : vector<6x256xf32> to vector<1x6x256xf32>
    tpu.vector_store %arg4[%c0_22, %c0_23, %c0_24], %295 {strides = array<i32>} : memref<1x6x256xf32, #tpu.memory_space<vmem>>, vector<1x6x256xf32>,
    return
  }
  func.func @transform_0(%arg0: i32) -> (i32, i32, i32) {
    %c0_i32 = arith.constant 0 : i32
    %c0_i32_0 = arith.constant 0 : i32
    %c0_i32_1 = arith.constant 0 : i32
    return %arg0, %c0_i32, %c0_i32_0 : i32, i32, i32
  }
  func.func @transform_1(%arg0: i32) -> (i32, i32) {
    %c0_i32 = arith.constant 0 : i32
    %c0_i32_0 = arith.constant 0 : i32
    %c0_i32_1 = arith.constant 0 : i32
    return %c0_i32, %c0_i32_0 : i32, i32
  }
  func.func @transform_2(%arg0: i32) -> (i32, i32) {
    %c0_i32 = arith.constant 0 : i32
    %c0_i32_0 = arith.constant 0 : i32
    %c0_i32_1 = arith.constant 0 : i32
    return %c0_i32, %c0_i32_0 : i32, i32
  }
  func.func @transform_3(%arg0: i32) -> (i32, i32, i32) {
    %c0_i32 = arith.constant 0 : i32
    %c0_i32_0 = arith.constant 0 : i32
    %c0_i32_1 = arith.constant 0 : i32
    return %arg0, %c0_i32, %c0_i32_0 : i32, i32, i32
  }
}

</mosaic_0001>

<llo_original>
// kernel: prongs_forward.1
$region0: #{prongs_forward.1}
  #allocation0 [shape = 'u32[]', space=smem, size = 0x4, offset = 0x4, fixed_abs, tag = 'smem constant byte address 0x4 - core index']
  #allocation1 [shape = 'u32[144,128]{1,0:T(1,128)}', space=vmem, size = 0x12000, scoped, tag = 'internal scratch']
  %s0 = inlined_call_operand.vmem [shape: f32[2,3,290], index: 0, kind: input, shape index: {}]
  %s1 = inlined_call_operand.vmem [shape: f32[6,27], index: 1, kind: input, shape index: {}]
  %s2 = inlined_call_operand.vmem [shape: f32[6,1], index: 2, kind: input, shape index: {}]
  %s3 = inlined_call_operand.vmem [shape: f32[2,6,256], index: 3, kind: output, shape index: {}]
  %s4 = sld [smem:[#allocation0]]
  $region45: #{prongs_forward.1} parent=0
    _
  %s6 = ssub.s32 1, %s4
  %s7 = scalar_select 0, %s6, %s4
  loop: start=0, step=1, limit=4
  $region2: #{prongs_forward.1} parent=0 // loop_pre_header
    _
  $region3: #{prongs_forward.1} parent=0 // loop_header
    %s9 = sphi 0, %s13
    %p10 = scmp.ge.s32.totalorder %s9, 4
    %s19 = sphi 0, %s21
    %s22 = sphi 0, %s19
    %s23 = sphi 0, %s22
    %s39 = sphi 0, %s23
    %s43 = sphi 0, %s43
    %s45 = sphi 0, %s43
    %s46 = sphi 0, %s45
    %s60 = sphi 0, %s46
    %s64 = sphi 0, %s64
    %s66 = sphi 0, %s64
    %s67 = sphi 0, %s66
    %s81 = sphi 0, %s67
    %s87 = sphi 0, %s89
    %s90 = sphi 0, %s87
    %s91 = sphi 0, %s90
    %s107 = sphi 0, %s91
  $region4: #{prongs_forward.1} parent=0 // loop_header_branch
    %12 = sbr.rel (%p10) target = $region8
  $region5: #{prongs_forward.1} parent=0 // loop_body
    %s14 = ssub.s32 %s9, 1
    %s15 = ssub.s32 %s9, 2
    %s16 = sadd.s32 %s9, 1
    %s17 = ssub.s32 %s9, %s16
    %p18 = scmp.eq.s32.totalorder %s17, 0
    %s20 = sadd.s32 %s19, 1
    %s21 = scalar_select %p18, %s19, %s20
    %p24 = pneg %p18
    %p25 = scmp.eq.s32.totalorder %s9, 1
    %p26 = por %p24, %p25
    %p27 = scmp.ne.s32.totalorder %s19, %s22
    %p28 = scmp.eq.s32.totalorder %s9, 0
    %p29 = por %p27, %p28
    %p30 = scmp.ne.s32.totalorder %s19, %s22
    %p31 = scmp.eq.s32.totalorder %s14, 1
    %p32 = por %p30, %p31
    %p33 = scmp.ne.s32.totalorder %s22, %s23
    %p34 = scmp.eq.s32.totalorder %s14, 0
    %p35 = por %p33, %p34
    %p36 = scmp.ne.s32.totalorder %s22, %s23
    %p37 = scmp.eq.s32.totalorder %s15, 1
    %p38 = por %p36, %p37
    %p40 = scmp.ne.s32.totalorder %s23, %s39
    %p41 = scmp.eq.s32.totalorder %s15, 0
    %p42 = por %p40, %p41
    %s44 = sadd.s32 %s43, 1
    %p47 = scmp.eq.s32.totalorder %s9, 1
    %p48 = scmp.ne.s32.totalorder %s43, %s45
    %p49 = scmp.eq.s32.totalorder %s9, 0
    %p50 = por %p48, %p49
    %p51 = scmp.ne.s32.totalorder %s43, %s45
    %p52 = scmp.eq.s32.totalorder %s14, 1
    %p53 = por %p51, %p52
    %p54 = scmp.ne.s32.totalorder %s45, %s46
    %p55 = scmp.eq.s32.totalorder %s14, 0
    %p56 = por %p54, %p55
    %p57 = scmp.ne.s32.totalorder %s45, %s46
    %p58 = scmp.eq.s32.totalorder %s15, 1
    %p59 = por %p57, %p58
    %p61 = scmp.ne.s32.totalorder %s46, %s60
    %p62 = scmp.eq.s32.totalorder %s15, 0
    %p63 = por %p61, %p62
    %s65 = sadd.s32 %s64, 1
    %p68 = scmp.eq.s32.totalorder %s9, 1
    %p69 = scmp.ne.s32.totalorder %s64, %s66
    %p70 = scmp.eq.s32.totalorder %s9, 0
    %p71 = por %p69, %p70
    %p72 = scmp.ne.s32.totalorder %s64, %s66
    %p73 = scmp.eq.s32.totalorder %s14, 1
    %p74 = por %p72, %p73
    %p75 = scmp.ne.s32.totalorder %s66, %s67
    %p76 = scmp.eq.s32.totalorder %s14, 0
    %p77 = por %p75, %p76
    %p78 = scmp.ne.s32.totalorder %s66, %s67
    %p79 = scmp.eq.s32.totalorder %s15, 1
    %p80 = por %p78, %p79
    %p82 = scmp.ne.s32.totalorder %s67, %s81
    %p83 = scmp.eq.s32.totalorder %s15, 0
    %p84 = por %p82, %p83
    %s85 = ssub.s32 %s9, %s16
    %p86 = scmp.eq.s32.totalorder %s85, 0
    %s88 = sadd.s32 %s87, 1
    %s89 = scalar_select %p86, %s87, %s88
    %p92 = pneg %p86
    %p93 = scmp.eq.s32.totalorder %s9, 1
    %p94 = por %p92, %p93
    %p95 = scmp.ne.s32.totalorder %s87, %s90
    %p96 = scmp.eq.s32.totalorder %s9, 0
    %p97 = por %p95, %p96
    %p98 = scmp.ne.s32.totalorder %s87, %s90
    %p99 = scmp.eq.s32.totalorder %s14, 1
    %p100 = por %p98, %p99
    %p101 = scmp.ne.s32.totalorder %s90, %s91
    %p102 = scmp.eq.s32.totalorder %s14, 0
    %p103 = por %p101, %p102
    %p104 = scmp.ne.s32.totalorder %s90, %s91
    %p105 = scmp.eq.s32.totalorder %s15, 1
    %p106 = por %p104, %p105
    %p108 = scmp.ne.s32.totalorder %s91, %s107
    %p109 = scmp.eq.s32.totalorder %s15, 0
    %p110 = por %p108, %p109
    %p111 = scmp.le.s32.totalorder 1, %s9
    %p112 = scmp.lt.s32.totalorder %s9, 3
    %p113 = pnand %p111, %p112
    %p114 = pneg %p113
    // Predicated region
    $region9: #{prongs_forward.1} parent=5 // pred_check
      _
    $region10: #{prongs_forward.1} parent=5 // pred_check_branch
      %116 = sbr.rel (%p113) target = $region12
    $region11: #{prongs_forward.1} parent=5 // pred_region
      %s117 = ssub.s32 %s9, 1
      // Predicated region
      $region13: #{prongs_forward.1} parent=11 // pred_check
        %p118 = pneg %p56
      $region14: #{prongs_forward.1} parent=11 // pred_check_branch
        %120 = sbr.rel (%p118) target = $region16
      $region15: #{prongs_forward.1} parent=11 // pred_region
        _
      $region16: #{prongs_forward.1} parent=11 // pred_fallthru
        _
      // Predicated region
      $region17: #{prongs_forward.1} parent=11 // pred_check
        %p121 = pneg %p77
      $region18: #{prongs_forward.1} parent=11 // pred_check_branch
        %123 = sbr.rel (%p121) target = $region20
      $region19: #{prongs_forward.1} parent=11 // pred_region
        _
      $region20: #{prongs_forward.1} parent=11 // pred_fallthru
        _
    $region12: #{prongs_forward.1} parent=5 // pred_fallthru
      _
    %p124 = scmp.lt.s32.totalorder %s9, 2
    // Predicated region
    $region21: #{prongs_forward.1} parent=5 // pred_check
      %p125 = pneg %p124
    $region22: #{prongs_forward.1} parent=5 // pred_check_branch
      %127 = sbr.rel (%p125) target = $region24
    $region23: #{prongs_forward.1} parent=5 // pred_region
      // Predicated region
      $region25: #{prongs_forward.1} parent=23 // pred_check
        %p128 = pneg %p29
      $region26: #{prongs_forward.1} parent=23 // pred_check_branch
        %130 = sbr.rel (%p128) target = $region28
      $region27: #{prongs_forward.1} parent=23 // pred_region
        %p131 = scmp.lt.s32.totalorder %s9, 1
        %s132 = scalar_select %p131, %s9, 1
        %s133 = smul.addr %s132, 3
        %s134 = smul.addr %s133, 4
        %s135 = scalar_lea.vmem %s0, %s134
      $region28: #{prongs_forward.1} parent=23 // pred_fallthru
        _
    $region24: #{prongs_forward.1} parent=5 // pred_fallthru
      _
    %p136 = scmp.le.s32.totalorder 1, %s9
    %p137 = scmp.lt.s32.totalorder %s9, 3
    %p138 = pnand %p136, %p137
    %p139 = pneg %p138
    // Predicated region
    $region29: #{prongs_forward.1} parent=5 // pred_check
      _
    $region30: #{prongs_forward.1} parent=5 // pred_check_branch
      %141 = sbr.rel (%p138) target = $region32
    $region31: #{prongs_forward.1} parent=5 // pred_region
      %s142 = ssub.s32 %s9, 1
      %p143 = scmp.lt.s32.totalorder %s14, 1
      %s144 = scalar_select %p143, %s14, 1
      %s145 = smul.addr %s144, 3
      %s146 = smul.addr %s145, 4
      %s147 = scalar_lea.vmem %s0, %s146
      %p148 = pneg %p35
      %p149 = pneg %p32
      %p150 = pneg %p56
      %p151 = pneg %p53
      %p152 = pneg %p77
      %p153 = pneg %p74
      %p154 = pneg %p103
      %p155 = pneg %p100
      %p156 = scmp.lt.s32.totalorder %s14, 1
      %s157 = scalar_select %p156, %s14, 1
      %s158 = smul.addr %s157, 2
      %s159 = smul.addr %s158, 8
      %s160 = scalar_lea.vmem %s3, %s159
      %p161 = scmp.lt.s32.totalorder %s14, 1
      %s162 = scalar_select %p161, %s14, 1
      %s163 = smul.addr %s162, 3
      %s164 = smul.addr %s163, 4
      %s165 = scalar_lea.vmem %s0, %s164
      %p166 = scmp.lt.s32.totalorder %s14, 1
      %s167 = scalar_select %p166, %s14, 1
      %s168 = smul.addr %s167, 2
      %s169 = smul.addr %s168, 8
      %s170 = scalar_lea.vmem %s3, %s169
      %v171 = vld [vmem:[%s1] sm:$0x3f]
      %v172 = vld [vmem:[%s165] sm:$0x77]
      %174 = vset.pattern.permute.xlu0 0
      %175 = vperm.xlu0 %174, %v171
      %v176 = vpop.permute.xlu0 %175
      %v179 = vlaneseq
      %v180 = vshrl.u32 %v179, 7
      %v181 = vsub.s32 0, %v180
      %v182 = vrot.slane %v172, %v181
      %v183 = vlaneseq
      %v184 = vshrl.u32 %v183, 7
      %v185 = vsub.s32 4, %v184
      %v186 = vrot.slane %v172, %v185
      %v189 = vlaneseq
      %v190 = vshrl.u32 %v189, 7
      %v191 = vsub.s32 0, %v190
      %v192 = vrot.slane %v182, %v191
      %v193 = vlaneseq
      %v194 = vshrl.u32 %v193, 7
      %v195 = vsub.s32 0, %v194
      %v196 = vrot.slane %v186, %v195
      %v197 = vmul.f32 %v176, %v192
      %v198 = vmul.f32 %v176, %v196
      %v199 = vadd.f32 %v197, 0.0
      %v200 = vadd.f32 %v198, 0.0
      %201 = vset.pattern.permute.xlu0 9
      %202 = vperm.xlu0 %201, %v171
      %v203 = vpop.permute.xlu0 %202
      %v205 = vlaneseq
      %v206 = vshrl.u32 %v205, 7
      %v207 = vsub.s32 1, %v206
      %v208 = vrot.slane %v172, %v207
      %v209 = vlaneseq
      %v210 = vshrl.u32 %v209, 7
      %v211 = vsub.s32 5, %v210
      %v212 = vrot.slane %v172, %v211
      %v215 = vlaneseq
      %v216 = vshrl.u32 %v215, 7
      %v217 = vsub.s32 1, %v216
      %v218 = vrot.slane %v208, %v217
      %v219 = vlaneseq
      %v220 = vshrl.u32 %v219, 7
      %v221 = vsub.s32 1, %v220
      %v222 = vrot.slane %v212, %v221
      %v223 = vmul.f32 %v203, %v218
      %v224 = vmul.f32 %v203, %v222
      %v225 = vadd.f32 %v199, %v223
      %v226 = vadd.f32 %v200, %v224
      %227 = vset.pattern.permute.xlu0 18
      %228 = vperm.xlu0 %227, %v171
      %v229 = vpop.permute.xlu0 %228
      %v231 = vlaneseq
      %v232 = vshrl.u32 %v231, 7
      %v233 = vsub.s32 2, %v232
      %v234 = vrot.slane %v172, %v233
      %v235 = vlaneseq
      %v236 = vshrl.u32 %v235, 7
      %v237 = vsub.s32 6, %v236
      %v238 = vrot.slane %v172, %v237
      %v241 = vlaneseq
      %v242 = vshrl.u32 %v241, 7
      %v243 = vsub.s32 2, %v242
      %v244 = vrot.slane %v234, %v243
      %v245 = vlaneseq
      %v246 = vshrl.u32 %v245, 7
      %v247 = vsub.s32 2, %v246
      %v248 = vrot.slane %v238, %v247
      %v249 = vmul.f32 %v229, %v244
      %v250 = vmul.f32 %v229, %v248
      %v251 = vadd.f32 %v225, %v249
      %v252 = vadd.f32 %v226, %v250
      %v253 = vld [vmem:[%s165] sm:$0x77]
      %v254 = vld [vmem:[%s165 + $0x8] sm:$0x7]
      %255 = vset.pattern.permute.xlu0 1
      %256 = vperm.xlu0 %255, %v171
      %v257 = vpop.permute.xlu0 %256
      %v261 = vlaneseq
      %v262 = vshrl.u32 %v261, 7
      %v263 = vsub.s32 0, %v262
      %v264 = vrot.slane %v253, %v263
      %v265 = vlaneseq
      %v266 = vshrl.u32 %v265, 7
      %v267 = vsub.s32 4, %v266
      %v268 = vrot.slane %v253, %v267
      %v269 = vlaneseq
      %v270 = vshrl.u32 %v269, 7
      %v271 = vsub.s32 0, %v270
      %v272 = vrot.slane %v254, %v271
      %v276 = vlaneseq
      %v277 = vshrl.u32 %v276, 7
      %v278 = vsub.s32 0, %v277
      %v279 = vrot.slane %v264, %v278
      %v280 = vlaneseq
      %v281 = vshrl.u32 %v280, 7
      %v282 = vsub.s32 0, %v281
      %v283 = vrot.slane %v268, %v282
      %v284 = vlaneseq
      %v285 = vshrl.u32 %v284, 7
      %v286 = vsub.s32 0, %v285
      %v287 = vrot.slane %v272, %v286
      %v288 = vmul.f32 %v257, %v279
      %v289 = vmul.f32 %v257, %v283
      %v290 = vmul.f32 %v257, %v287
      %294 = vrot.lane.b32.xlu0 %v288, 127
      %v295 = vpop.permute.xlu0 %294
      %296 = vrot.lane.b32.xlu0 %v289, 127
      %v297 = vpop.permute.xlu0 %296
      %298 = vrot.lane.b32.xlu0 %v290, 127
      %v299 = vpop.permute.xlu0 %298
      %vm300 = vcmask 1039360
      %v301 = vsel %vm300, %v295, %v297
      %v302 = vsel %vm300, %v297, %v299
      %v305 = vadd.f32 %v251, %v301
      %v306 = vadd.f32 %v252, %v302
      %307 = vset.pattern.permute.xlu0 10
      %308 = vperm.xlu0 %307, %v171
      %v309 = vpop.permute.xlu0 %308
      %v311 = vlaneseq
      %v312 = vshrl.u32 %v311, 7
      %v313 = vsub.s32 1, %v312
      %v314 = vrot.slane %v253, %v313
      %v315 = vlaneseq
      %v316 = vshrl.u32 %v315, 7
      %v317 = vsub.s32 5, %v316
      %v318 = vrot.slane %v253, %v317
      %v319 = vlaneseq
      %v320 = vshrl.u32 %v319, 7
      %v321 = vsub.s32 1, %v320
      %v322 = vrot.slane %v254, %v321
      %v326 = vlaneseq
      %v327 = vshrl.u32 %v326, 7
      %v328 = vsub.s32 1, %v327
      %v329 = vrot.slane %v314, %v328
      %v330 = vlaneseq
      %v331 = vshrl.u32 %v330, 7
      %v332 = vsub.s32 1, %v331
      %v333 = vrot.slane %v318, %v332
      %v334 = vlaneseq
      %v335 = vshrl.u32 %v334, 7
      %v336 = vsub.s32 1, %v335
      %v337 = vrot.slane %v322, %v336
      %v338 = vmul.f32 %v309, %v329
      %v339 = vmul.f32 %v309, %v333
      %v340 = vmul.f32 %v309, %v337
      %344 = vrot.lane.b32.xlu0 %v338, 127
      %v345 = vpop.permute.xlu0 %344
      %346 = vrot.lane.b32.xlu0 %v339, 127
      %v347 = vpop.permute.xlu0 %346
      %348 = vrot.lane.b32.xlu0 %v340, 127
      %v349 = vpop.permute.xlu0 %348
      %v350 = vsel %vm300, %v345, %v347
      %v351 = vsel %vm300, %v347, %v349
      %v354 = vadd.f32 %v305, %v350
      %v355 = vadd.f32 %v306, %v351
      %356 = vset.pattern.permute.xlu0 19
      %357 = vperm.xlu0 %356, %v171
      %v358 = vpop.permute.xlu0 %357
      %v360 = vlaneseq
      %v361 = vshrl.u32 %v360, 7
      %v362 = vsub.s32 2, %v361
      %v363 = vrot.slane %v253, %v362
      %v364 = vlaneseq
      %v365 = vshrl.u32 %v364, 7
      %v366 = vsub.s32 6, %v365
      %v367 = vrot.slane %v253, %v366
      %v368 = vlaneseq
      %v369 = vshrl.u32 %v368, 7
      %v370 = vsub.s32 2, %v369
      %v371 = vrot.slane %v254, %v370
      %v375 = vlaneseq
      %v376 = vshrl.u32 %v375, 7
      %v377 = vsub.s32 2, %v376
      %v378 = vrot.slane %v363, %v377
      %v379 = vlaneseq
      %v380 = vshrl.u32 %v379, 7
      %v381 = vsub.s32 2, %v380
      %v382 = vrot.slane %v367, %v381
      %v383 = vlaneseq
      %v384 = vshrl.u32 %v383, 7
      %v385 = vsub.s32 2, %v384
      %v386 = vrot.slane %v371, %v385
      %v387 = vmul.f32 %v358, %v378
      %v388 = vmul.f32 %v358, %v382
      %v389 = vmul.f32 %v358, %v386
      %393 = vrot.lane.b32.xlu0 %v387, 127
      %v394 = vpop.permute.xlu0 %393
      %395 = vrot.lane.b32.xlu0 %v388, 127
      %v396 = vpop.permute.xlu0 %395
      %397 = vrot.lane.b32.xlu0 %v389, 127
      %v398 = vpop.permute.xlu0 %397
      %v399 = vsel %vm300, %v394, %v396
      %v400 = vsel %vm300, %v396, %v398
      %v403 = vadd.f32 %v354, %v399
      %v404 = vadd.f32 %v355, %v400
      %405 = vset.pattern.permute.xlu0 2
      %406 = vperm.xlu0 %405, %v171
      %v407 = vpop.permute.xlu0 %406
      %v409 = vmul.f32 %v407, %v279
      %v410 = vmul.f32 %v407, %v283
      %v411 = vmul.f32 %v407, %v287
      %415 = vrot.lane.b32.xlu0 %v409, 126
      %v416 = vpop.permute.xlu0 %415
      %417 = vrot.lane.b32.xlu0 %v410, 126
      %v418 = vpop.permute.xlu0 %417
      %419 = vrot.lane.b32.xlu0 %v411, 126
      %v420 = vpop.permute.xlu0 %419
      %vm421 = vcmask 1031168
      %v422 = vsel %vm421, %v416, %v418
      %v423 = vsel %vm421, %v418, %v420
      %v426 = vadd.f32 %v403, %v422
      %v427 = vadd.f32 %v404, %v423
      %428 = vset.pattern.permute.xlu0 11
      %429 = vperm.xlu0 %428, %v171
      %v430 = vpop.permute.xlu0 %429
      %v432 = vmul.f32 %v430, %v329
      %v433 = vmul.f32 %v430, %v333
      %v434 = vmul.f32 %v430, %v337
      %438 = vrot.lane.b32.xlu0 %v432, 126
      %v439 = vpop.permute.xlu0 %438
      %440 = vrot.lane.b32.xlu0 %v433, 126
      %v441 = vpop.permute.xlu0 %440
      %442 = vrot.lane.b32.xlu0 %v434, 126
      %v443 = vpop.permute.xlu0 %442
      %v444 = vsel %vm421, %v439, %v441
      %v445 = vsel %vm421, %v441, %v443
      %v448 = vadd.f32 %v426, %v444
      %v449 = vadd.f32 %v427, %v445
      %450 = vset.pattern.permute.xlu0 20
      %451 = vperm.xlu0 %450, %v171
      %v452 = vpop.permute.xlu0 %451
      %v454 = vmul.f32 %v452, %v378
      %v455 = vmul.f32 %v452, %v382
      %v456 = vmul.f32 %v452, %v386
      %460 = vrot.lane.b32.xlu0 %v454, 126
      %v461 = vpop.permute.xlu0 %460
      %462 = vrot.lane.b32.xlu0 %v455, 126
      %v463 = vpop.permute.xlu0 %462
      %464 = vrot.lane.b32.xlu0 %v456, 126
      %v465 = vpop.permute.xlu0 %464
      %v466 = vsel %vm421, %v461, %v463
      %v467 = vsel %vm421, %v463, %v465
      %v470 = vadd.f32 %v448, %v466
      %v471 = vadd.f32 %v449, %v467
      %472 = vset.pattern.permute.xlu0 3
      %473 = vperm.xlu0 %472, %v171
      %v474 = vpop.permute.xlu0 %473
      %v476 = vmul.f32 %v474, %v279
      %v477 = vmul.f32 %v474, %v283
      %v478 = vmul.f32 %v474, %v287
      %482 = vrot.lane.b32.xlu0 %v476, 112
      %v483 = vpop.permute.xlu0 %482
      %484 = vrot.lane.b32.xlu0 %v477, 112
      %v485 = vpop.permute.xlu0 %484
      %486 = vrot.lane.b32.xlu0 %v478, 112
      %v487 = vpop.permute.xlu0 %486
      %vm488 = vcmask 916480
      %v489 = vsel %vm488, %v483, %v485
      %v490 = vsel %vm488, %v485, %v487
      %v493 = vadd.f32 %v470, %v489
      %v494 = vadd.f32 %v471, %v490
      %495 = vset.pattern.permute.xlu0 12
      %496 = vperm.xlu0 %495, %v171
      %v497 = vpop.permute.xlu0 %496
      %v499 = vmul.f32 %v497, %v329
      %v500 = vmul.f32 %v497, %v333
      %v501 = vmul.f32 %v497, %v337
      %505 = vrot.lane.b32.xlu0 %v499, 112
      %v506 = vpop.permute.xlu0 %505
      %507 = vrot.lane.b32.xlu0 %v500, 112
      %v508 = vpop.permute.xlu0 %507
      %509 = vrot.lane.b32.xlu0 %v501, 112
      %v510 = vpop.permute.xlu0 %509
      %v511 = vsel %vm488, %v506, %v508
      %v512 = vsel %vm488, %v508, %v510
      %v515 = vadd.f32 %v493, %v511
      %v516 = vadd.f32 %v494, %v512
      %517 = vset.pattern.permute.xlu0 21
      %518 = vperm.xlu0 %517, %v171
      %v519 = vpop.permute.xlu0 %518
      %v521 = vmul.f32 %v519, %v378
      %v522 = vmul.f32 %v519, %v382
      %v523 = vmul.f32 %v519, %v386
      %527 = vrot.lane.b32.xlu0 %v521, 112
      %v528 = vpop.permute.xlu0 %527
      %529 = vrot.lane.b32.xlu0 %v522, 112
      %v530 = vpop.permute.xlu0 %529
      %531 = vrot.lane.b32.xlu0 %v523, 112
      %v532 = vpop.permute.xlu0 %531
      %v533 = vsel %vm488, %v528, %v530
      %v534 = vsel %vm488, %v530, %v532
      %v537 = vadd.f32 %v515, %v533
      %v538 = vadd.f32 %v516, %v534
      %539 = vset.pattern.permute.xlu0 4
      %540 = vperm.xlu0 %539, %v171
      %v541 = vpop.permute.xlu0 %540
      %v543 = vmul.f32 %v541, %v279
      %v544 = vmul.f32 %v541, %v283
      %v545 = vmul.f32 %v541, %v287
      %549 = vrot.lane.b32.xlu0 %v543, 111
      %v550 = vpop.permute.xlu0 %549
      %551 = vrot.lane.b32.xlu0 %v544, 111
      %v552 = vpop.permute.xlu0 %551
      %553 = vrot.lane.b32.xlu0 %v545, 111
      %v554 = vpop.permute.xlu0 %553
      %vm555 = vcmask 908288
      %v556 = vsel %vm555, %v550, %v552
      %v557 = vsel %vm555, %v552, %v554
      %v560 = vadd.f32 %v537, %v556
      %v561 = vadd.f32 %v538, %v557
      %562 = vset.pattern.permute.xlu0 13
      %563 = vperm.xlu0 %562, %v171
      %v564 = vpop.permute.xlu0 %563
      %v566 = vmul.f32 %v564, %v329
      %v567 = vmul.f32 %v564, %v333
      %v568 = vmul.f32 %v564, %v337
      %572 = vrot.lane.b32.xlu0 %v566, 111
      %v573 = vpop.permute.xlu0 %572
      %574 = vrot.lane.b32.xlu0 %v567, 111
      %v575 = vpop.permute.xlu0 %574
      %576 = vrot.lane.b32.xlu0 %v568, 111
      %v577 = vpop.permute.xlu0 %576
      %v578 = vsel %vm555, %v573, %v575
      %v579 = vsel %vm555, %v575, %v577
      %v582 = vadd.f32 %v560, %v578
      %v583 = vadd.f32 %v561, %v579
      %584 = vset.pattern.permute.xlu0 22
      %585 = vperm.xlu0 %584, %v171
      %v586 = vpop.permute.xlu0 %585
      %v588 = vmul.f32 %v586, %v378
      %v589 = vmul.f32 %v586, %v382
      %v590 = vmul.f32 %v586, %v386
      %594 = vrot.lane.b32.xlu0 %v588, 111
      %v595 = vpop.permute.xlu0 %594
      %596 = vrot.lane.b32.xlu0 %v589, 111
      %v597 = vpop.permute.xlu0 %596
      %598 = vrot.lane.b32.xlu0 %v590, 111
      %v599 = vpop.permute.xlu0 %598
      %v600 = vsel %vm555, %v595, %v597
      %v601 = vsel %vm555, %v597, %v599
      %v604 = vadd.f32 %v582, %v600
      %v605 = vadd.f32 %v583, %v601
      %606 = vset.pattern.permute.xlu0 5
      %607 = vperm.xlu0 %606, %v171
      %v608 = vpop.permute.xlu0 %607
      %v610 = vmul.f32 %v608, %v279
      %v611 = vmul.f32 %v608, %v283
      %v612 = vmul.f32 %v608, %v287
      %616 = vrot.lane.b32.xlu0 %v610, 110
      %v617 = vpop.permute.xlu0 %616
      %618 = vrot.lane.b32.xlu0 %v611, 110
      %v619 = vpop.permute.xlu0 %618
      %620 = vrot.lane.b32.xlu0 %v612, 110
      %v621 = vpop.permute.xlu0 %620
      %vm622 = vcmask 900096
      %v623 = vsel %vm622, %v617, %v619
      %v624 = vsel %vm622, %v619, %v621
      %v627 = vadd.f32 %v604, %v623
      %v628 = vadd.f32 %v605, %v624
      %629 = vset.pattern.permute.xlu0 14
      %630 = vperm.xlu0 %629, %v171
      %v631 = vpop.permute.xlu0 %630
      %v633 = vmul.f32 %v631, %v329
      %v634 = vmul.f32 %v631, %v333
      %v635 = vmul.f32 %v631, %v337
      %639 = vrot.lane.b32.xlu0 %v633, 110
      %v640 = vpop.permute.xlu0 %639
      %641 = vrot.lane.b32.xlu0 %v634, 110
      %v642 = vpop.permute.xlu0 %641
      %643 = vrot.lane.b32.xlu0 %v635, 110
      %v644 = vpop.permute.xlu0 %643
      %v645 = vsel %vm622, %v640, %v642
      %v646 = vsel %vm622, %v642, %v644
      %v649 = vadd.f32 %v627, %v645
      %v650 = vadd.f32 %v628, %v646
      %651 = vset.pattern.permute.xlu0 23
      %652 = vperm.xlu0 %651, %v171
      %v653 = vpop.permute.xlu0 %652
      %v655 = vmul.f32 %v653, %v378
      %v656 = vmul.f32 %v653, %v382
      %v657 = vmul.f32 %v653, %v386
      %661 = vrot.lane.b32.xlu0 %v655, 110
      %v662 = vpop.permute.xlu0 %661
      %663 = vrot.lane.b32.xlu0 %v656, 110
      %v664 = vpop.permute.xlu0 %663
      %665 = vrot.lane.b32.xlu0 %v657, 110
      %v666 = vpop.permute.xlu0 %665
      %v667 = vsel %vm622, %v662, %v664
      %v668 = vsel %vm622, %v664, %v666
      %v671 = vadd.f32 %v649, %v667
      %v672 = vadd.f32 %v650, %v668
      %673 = vset.pattern.permute.xlu0 6
      %674 = vperm.xlu0 %673, %v171
      %v675 = vpop.permute.xlu0 %674
      %v677 = vmul.f32 %v675, %v279
      %v678 = vmul.f32 %v675, %v283
      %v679 = vmul.f32 %v675, %v287
      %683 = vrot.lane.b32.xlu0 %v677, 96
      %v684 = vpop.permute.xlu0 %683
      %685 = vrot.lane.b32.xlu0 %v678, 96
      %v686 = vpop.permute.xlu0 %685
      %687 = vrot.lane.b32.xlu0 %v679, 96
      %v688 = vpop.permute.xlu0 %687
      %vm689 = vcmask 785408
      %v690 = vsel %vm689, %v684, %v686
      %v691 = vsel %vm689, %v686, %v688
      %v694 = vadd.f32 %v671, %v690
      %v695 = vadd.f32 %v672, %v691
      %696 = vset.pattern.permute.xlu0 15
      %697 = vperm.xlu0 %696, %v171
      %v698 = vpop.permute.xlu0 %697
      %v700 = vmul.f32 %v698, %v329
      %v701 = vmul.f32 %v698, %v333
      %v702 = vmul.f32 %v698, %v337
      %706 = vrot.lane.b32.xlu0 %v700, 96
      %v707 = vpop.permute.xlu0 %706
      %708 = vrot.lane.b32.xlu0 %v701, 96
      %v709 = vpop.permute.xlu0 %708
      %710 = vrot.lane.b32.xlu0 %v702, 96
      %v711 = vpop.permute.xlu0 %710
      %v712 = vsel %vm689, %v707, %v709
      %v713 = vsel %vm689, %v709, %v711
      %v716 = vadd.f32 %v694, %v712
      %v717 = vadd.f32 %v695, %v713
      %718 = vset.pattern.permute.xlu0 24
      %719 = vperm.xlu0 %718, %v171
      %v720 = vpop.permute.xlu0 %719
      %v722 = vmul.f32 %v720, %v378
      %v723 = vmul.f32 %v720, %v382
      %v724 = vmul.f32 %v720, %v386
      %728 = vrot.lane.b32.xlu0 %v722, 96
      %v729 = vpop.permute.xlu0 %728
      %730 = vrot.lane.b32.xlu0 %v723, 96
      %v731 = vpop.permute.xlu0 %730
      %732 = vrot.lane.b32.xlu0 %v724, 96
      %v733 = vpop.permute.xlu0 %732
      %v734 = vsel %vm689, %v729, %v731
      %v735 = vsel %vm689, %v731, %v733
      %v738 = vadd.f32 %v716, %v734
      %v739 = vadd.f32 %v717, %v735
      %740 = vset.pattern.permute.xlu0 7
      %741 = vperm.xlu0 %740, %v171
      %v742 = vpop.permute.xlu0 %741
      %v744 = vmul.f32 %v742, %v279
      %v745 = vmul.f32 %v742, %v283
      %v746 = vmul.f32 %v742, %v287
      %750 = vrot.lane.b32.xlu0 %v744, 95
      %v751 = vpop.permute.xlu0 %750
      %752 = vrot.lane.b32.xlu0 %v745, 95
      %v753 = vpop.permute.xlu0 %752
      %754 = vrot.lane.b32.xlu0 %v746, 95
      %v755 = vpop.permute.xlu0 %754
      %vm756 = vcmask 777216
      %v757 = vsel %vm756, %v751, %v753
      %v758 = vsel %vm756, %v753, %v755
      %v761 = vadd.f32 %v738, %v757
      %v762 = vadd.f32 %v739, %v758
      %763 = vset.pattern.permute.xlu0 16
      %764 = vperm.xlu0 %763, %v171
      %v765 = vpop.permute.xlu0 %764
      %v767 = vmul.f32 %v765, %v329
      %v768 = vmul.f32 %v765, %v333
      %v769 = vmul.f32 %v765, %v337
      %773 = vrot.lane.b32.xlu0 %v767, 95
      %v774 = vpop.permute.xlu0 %773
      %775 = vrot.lane.b32.xlu0 %v768, 95
      %v776 = vpop.permute.xlu0 %775
      %777 = vrot.lane.b32.xlu0 %v769, 95
      %v778 = vpop.permute.xlu0 %777
      %v779 = vsel %vm756, %v774, %v776
      %v780 = vsel %vm756, %v776, %v778
      %v783 = vadd.f32 %v761, %v779
      %v784 = vadd.f32 %v762, %v780
      %785 = vset.pattern.permute.xlu0 25
      %786 = vperm.xlu0 %785, %v171
      %v787 = vpop.permute.xlu0 %786
      %v789 = vmul.f32 %v787, %v378
      %v790 = vmul.f32 %v787, %v382
      %v791 = vmul.f32 %v787, %v386
      %795 = vrot.lane.b32.xlu0 %v789, 95
      %v796 = vpop.permute.xlu0 %795
      %797 = vrot.lane.b32.xlu0 %v790, 95
      %v798 = vpop.permute.xlu0 %797
      %799 = vrot.lane.b32.xlu0 %v791, 95
      %v800 = vpop.permute.xlu0 %799
      %v801 = vsel %vm756, %v796, %v798
      %v802 = vsel %vm756, %v798, %v800
      %v805 = vadd.f32 %v783, %v801
      %v806 = vadd.f32 %v784, %v802
      %807 = vset.pattern.permute.xlu0 8
      %808 = vperm.xlu0 %807, %v171
      %v809 = vpop.permute.xlu0 %808
      %v811 = vmul.f32 %v809, %v279
      %v812 = vmul.f32 %v809, %v283
      %v813 = vmul.f32 %v809, %v287
      %817 = vrot.lane.b32.xlu0 %v811, 94
      %v818 = vpop.permute.xlu0 %817
      %819 = vrot.lane.b32.xlu0 %v812, 94
      %v820 = vpop.permute.xlu0 %819
      %821 = vrot.lane.b32.xlu0 %v813, 94
      %v822 = vpop.permute.xlu0 %821
      %vm823 = vcmask 769024
      %v824 = vsel %vm823, %v818, %v820
      %v825 = vsel %vm823, %v820, %v822
      %v828 = vadd.f32 %v805, %v824
      %v829 = vadd.f32 %v806, %v825
      %830 = vset.pattern.permute.xlu0 17
      %831 = vperm.xlu0 %830, %v171
      %v832 = vpop.permute.xlu0 %831
      %v834 = vmul.f32 %v832, %v329
      %v835 = vmul.f32 %v832, %v333
      %v836 = vmul.f32 %v832, %v337
      %840 = vrot.lane.b32.xlu0 %v834, 94
      %v841 = vpop.permute.xlu0 %840
      %842 = vrot.lane.b32.xlu0 %v835, 94
      %v843 = vpop.permute.xlu0 %842
      %844 = vrot.lane.b32.xlu0 %v836, 94
      %v845 = vpop.permute.xlu0 %844
      %v846 = vsel %vm823, %v841, %v843
      %v847 = vsel %vm823, %v843, %v845
      %v850 = vadd.f32 %v828, %v846
      %v851 = vadd.f32 %v829, %v847
      %852 = vset.pattern.permute.xlu0 26
      %853 = vperm.xlu0 %852, %v171
      %v854 = vpop.permute.xlu0 %853
      %v856 = vmul.f32 %v854, %v378
      %v857 = vmul.f32 %v854, %v382
      %v858 = vmul.f32 %v854, %v386
      %862 = vrot.lane.b32.xlu0 %v856, 94
      %v863 = vpop.permute.xlu0 %862
      %864 = vrot.lane.b32.xlu0 %v857, 94
      %v865 = vpop.permute.xlu0 %864
      %866 = vrot.lane.b32.xlu0 %v858, 94
      %v867 = vpop.permute.xlu0 %866
      %v868 = vsel %vm823, %v863, %v865
      %v869 = vsel %vm823, %v865, %v867
      %v872 = vadd.f32 %v850, %v868
      %v873 = vadd.f32 %v851, %v869
      %v874 = vld [vmem:[%s2] sm:$0x3f]
      %876 = vset.pattern.permute.xlu0 0
      %877 = vperm.xlu0 %876, %v874
      %v878 = vpop.permute.xlu0 %877
      %v880 = vadd.f32 %v872, %v878
      %v881 = vadd.f32 %v873, %v878
      %882 = vst [vmem:[%s170] sm:$0x3f] %v880
      %883 = vst [vmem:[%s170 + $0x8] sm:$0x3f] %v881
      %p884 = scmp.lt.s32.totalorder %s14, 1
      %s885 = scalar_select %p884, %s14, 1
      %s886 = smul.addr %s885, 2
      %s887 = smul.addr %s886, 8
      %s888 = scalar_lea.vmem %s3, %s887
      // Predicated region
      $region33: #{prongs_forward.1} parent=31 // pred_check
        %p889 = pneg %p100
      $region34: #{prongs_forward.1} parent=31 // pred_check_branch
        %891 = sbr.rel (%p889) target = $region36
      $region35: #{prongs_forward.1} parent=31 // pred_region
        _
      $region36: #{prongs_forward.1} parent=31 // pred_fallthru
        _
    $region32: #{prongs_forward.1} parent=5 // pred_fallthru
      _
    %p892 = scmp.le.s32.totalorder 2, %s9
    // Predicated region
    $region37: #{prongs_forward.1} parent=5 // pred_check
      %p893 = pneg %p892
    $region38: #{prongs_forward.1} parent=5 // pred_check_branch
      %895 = sbr.rel (%p893) target = $region40
    $region39: #{prongs_forward.1} parent=5 // pred_region
      %s896 = ssub.s32 %s9, 2
      // Predicated region
      $region41: #{prongs_forward.1} parent=39 // pred_check
        %p897 = pneg %p106
      $region42: #{prongs_forward.1} parent=39 // pred_check_branch
        %899 = sbr.rel (%p897) target = $region44
      $region43: #{prongs_forward.1} parent=39 // pred_region
        %p900 = scmp.lt.s32.totalorder %s15, 1
        %s901 = scalar_select %p900, %s15, 1
        %s902 = smul.addr %s901, 2
        %s903 = smul.addr %s902, 8
        %s904 = scalar_lea.vmem %s3, %s903
      $region44: #{prongs_forward.1} parent=39 // pred_fallthru
        _
    $region40: #{prongs_forward.1} parent=5 // pred_fallthru
      _
  $region6: #{prongs_forward.1} parent=0 // loop_footer
    %s13 = sadd.s32 1, %s9
  $region7: #{prongs_forward.1} parent=0 // loop_footer_branch
    %8 = sbr.rel target = $region3
  $region8: #{prongs_forward.1} parent=0 // loop_exit
    _

</llo_original>
